<compile_context>
chip_gen: v5e
topology: v5e:2x2
jax: 0.10.0
libtpu: 0.0.40
codegen_flags: <defaults>
</compile_context>

<pallas_src>
import functools

import jax
import jax.numpy as jnp
from jax import lax
from jax.experimental import pallas as pl
from jax.experimental.pallas import tpu as pltpu

LANES = 128
SUBLANES = 8


def _round_up(a, b):
    return pl.cdiv(a, b) * b


def _detect_num_tensorcores():
    """Best-effort TensorCores-per-chip query: 2 on v7x-class chips, else 1."""
    try:
        info = pltpu.get_tpu_info()
    except Exception:
        return 1
    for attr in ("num_tensorcores", "tensorcores_per_chip", "cores_per_chip", "num_cores"):
        v = getattr(info, attr, None)
        if isinstance(v, int) and v >= 1:
            return min(int(v), 2)
    return 1


def _get_outnorm(img_shape, out_norm):
    norm = 1.0
    if out_norm:
        if "b" in out_norm:
            norm /= img_shape[0]
        if "c" in out_norm:
            norm /= img_shape[-3]
        if "i" in out_norm:
            norm /= img_shape[-1] * img_shape[-2]
    return norm


def _charbonnier_kernel(x_ref, y_ref, out_ref, *, eps2, rows_total, block_rows,
                        nblk_per_core, needs_mask):
    # Grid: (core, reduction_step). Output block index depends only on `core`,
    # so out_ref stays resident across the reduction axis -> accumulator.
    i = pl.program_id(1)

    @pl.when(i == 0)
    def _():
        out_ref[...] = jnp.zeros_like(out_ref)

    x = x_ref[...].astype(jnp.float32)   # native-dtype stream, per-tile upcast
    y = y_ref[...].astype(jnp.float32)
    d = x - y
    val = jnp.sqrt(d * d + eps2)         # eps2 is a baked Python float

    if needs_mask:
        # Mask rows beyond the logical row count (partial edge block and/or
        # overrun blocks created by the per-core block split). Padded rows of
        # an edge block hold unspecified values; jnp.where discards them.
        blk = pl.program_id(0) * nblk_per_core + i
        row0 = blk * block_rows
        row_ids = lax.broadcasted_iota(jnp.int32, val.shape, 0) + row0
        val = jnp.where(row_ids < rows_total, val, 0.0)

    # Sublane-group partial sum: pure VPU adds, no cross-lane work in the
    # hot loop. block_rows is always a multiple of 8 by construction.
    out_ref[...] += jnp.sum(val.reshape(-1, SUBLANES, LANES), axis=0)


def charbonnier_loss(x, y, eps=1e-6, out_norm="bci", block_rows=8192, num_cores=None):
    """Charbonnier loss matching the PyTorch module. x, y: (B, C, H, W)."""
    assert x.shape == y.shape
    norm = _get_outnorm(x.shape, out_norm)

    if num_cores is None:
        num_cores = _detect_num_tensorcores()
    num_cores = max(1, int(num_cores))

    eps = float(eps)
    eps2 = eps * eps

    xf = x.reshape(-1)                      # free (contiguous) reshape, native dtype
    yf = y.reshape(-1)
    n = xf.shape[0]

    rows_full = n // LANES                  # full 128-lane rows
    tail = n - rows_full * LANES            # < 128 leftover elements

    total = jnp.float32(0.0)

    if rows_full > 0:
        itemsize = x.dtype.itemsize
        # sublane multiple per dtype packing: f32 -> 8, bf16/f16 -> 16, 8-bit -> 32
        sub_mult = max(SUBLANES, 32 // max(int(itemsize), 1))

        block_rows = _round_up(max(int(block_rows), sub_mult), sub_mult)
        per_core_rows = pl.cdiv(rows_full, num_cores)
        block_rows_eff = min(block_rows, _round_up(per_core_rows, sub_mult))

        total_blocks = pl.cdiv(rows_full, block_rows_eff)
        nblk_per_core = pl.cdiv(total_blocks, num_cores)
        needs_mask = (rows_full % block_rows_eff != 0) or \
                     (num_cores * nblk_per_core != total_blocks)

        if tail > 0:
            x2 = xf[: rows_full * LANES].reshape(rows_full, LANES)
            y2 = yf[: rows_full * LANES].reshape(rows_full, LANES)
        else:
            x2 = xf.reshape(rows_full, LANES)
            y2 = yf.reshape(rows_full, LANES)

        kernel = functools.partial(
            _charbonnier_kernel,
            eps2=eps2,
            rows_total=rows_full,
            block_rows=block_rows_eff,
            nblk_per_core=nblk_per_core,
            needs_mask=needs_mask,
        )

        in_map = lambda c, i: (c * nblk_per_core + i, 0)

        if num_cores > 1:
            dim_sem = (pltpu.CORE_PARALLEL, pltpu.ARBITRARY)
        else:
            dim_sem = ("arbitrary", "arbitrary")

        elems = rows_full * LANES
        partials = pl.pallas_call(
            kernel,
            out_shape=jax.ShapeDtypeStruct((num_cores * SUBLANES, LANES), jnp.float32),
            grid_spec=pltpu.PrefetchScalarGridSpec(
                num_scalar_prefetch=0,
                grid=(num_cores, nblk_per_core),
                in_specs=[
                    pl.BlockSpec((block_rows_eff, LANES), in_map),
                    pl.BlockSpec((block_rows_eff, LANES), in_map),
                ],
                out_specs=pl.BlockSpec((SUBLANES, LANES), lambda c, i: (c, 0)),
            ),
            compiler_params=pltpu.CompilerParams(
                dimension_semantics=dim_sem,
                vmem_limit_bytes=48 * 1024 * 1024,
            ),
            cost_estimate=pl.CostEstimate(
                flops=4 * elems,
                transcendentals=elems,
                bytes_accessed=2 * elems * int(itemsize)
                + num_cores * SUBLANES * LANES * 4,
            ),
        )(x2, y2)

        total = total + jnp.sum(partials)

    if tail > 0:
        # Sub-row tail (< 128 elements): plain jnp, negligible cost.
        tx = xf[rows_full * LANES:].astype(jnp.float32)
        ty = yf[rows_full * LANES:].astype(jnp.float32)
        dt = tx - ty
        total = total + jnp.sum(jnp.sqrt(dt * dt + eps2))

    return total * jnp.float32(norm)


def charbonnier_loss_ref(x, y, eps=1e-6, out_norm="bci"):
    norm = _get_outnorm(x.shape, out_norm)
    x = x.astype(jnp.float32)
    y = y.astype(jnp.float32)
    return jnp.sum(jnp.sqrt((x - y) ** 2 + float(eps) ** 2)) * norm


if __name__ == "__main__":
    key = jax.random.PRNGKey(0)
    kx, ky = jax.random.split(key)
    B, C, H, W = 2, 4, 16, 16
    x = jax.random.normal(kx, (B, C, H, W), dtype=jnp.float32)
    y = jax.random.normal(ky, (B, C, H, W), dtype=jnp.float32)

    out = jax.block_until_ready(charbonnier_loss(x, y, eps=1e-6, out_norm="bci"))
    ref = charbonnier_loss_ref(x, y, eps=1e-6, out_norm="bci")
    assert jnp.allclose(out, ref, rtol=1e-5, atol=1e-5), (out, ref)

    # Non-lane-aligned shape: exercises the masked partial block + jnp tail.
    kx2, ky2 = jax.random.split(ky)
    x2 = jax.random.normal(kx2, (2, 3, 7, 7), dtype=jnp.float32)
    y2 = jax.random.normal(ky2, (2, 3, 7, 7), dtype=jnp.float32)
    out2 = jax.block_until_ready(charbonnier_loss(x2, y2))
    ref2 = charbonnier_loss_ref(x2, y2)
    assert jnp.allclose(out2, ref2, rtol=1e-5, atol=1e-5), (out2, ref2)

    # Native bf16 path (no wrapper upcast; per-tile upcast inside the kernel).
    xb = x.astype(jnp.bfloat16)
    yb = y.astype(jnp.bfloat16)
    out3 = jax.block_until_ready(charbonnier_loss(xb, yb))
    ref3 = charbonnier_loss_ref(xb, yb)
    assert jnp.allclose(out3, ref3, rtol=1e-5, atol=1e-4), (out3, ref3)

    print("KERNEL_OK")
</pallas_src>

<mosaic_0001>
module attributes {stable_mosaic.version = 11 : i64} {
  func.func @_charbonnier_kernel(%arg0: i32, %arg1: i32, %arg2: memref<16x128xf32, #tpu.memory_space<vmem>>, %arg3: memref<16x128xf32, #tpu.memory_space<vmem>>, %arg4: memref<8x128xf32, #tpu.memory_space<vmem>>) attributes {dimension_semantics = [#tpu.dimension_semantics<arbitrary>, #tpu.dimension_semantics<arbitrary>], iteration_bounds = array<i64: 1, 1>, scalar_prefetch = 0 : i64, scratch_operands = 0 : i64, tpu.core_type = #tpu.core_type<tc>, window_params = [{transform_indices = @transform_0, window_bounds = array<i64: 16, 128>}, {transform_indices = @transform_1, window_bounds = array<i64: 16, 128>}, {transform_indices = @transform_2, window_bounds = array<i64: 8, 128>}]} {
    %c0_i32 = arith.constant 0 : i32
    %0 = arith.cmpi eq, %arg1, %c0_i32 : i32
    %1 = arith.extui %0 : i1 to i32
    %c0_i32_0 = arith.constant 0 : i32
    %2 = arith.cmpi ne, %1, %c0_i32_0 : i32
    scf.if %2 {
      %cst_9 = arith.constant 0.000000e+00 : f32
      %15 = vector.broadcast %cst_9 : f32 to vector<8x128xf32>
      %c0_10 = arith.constant 0 : index
      %c0_11 = arith.constant 0 : index
      %16 = vector.load %arg4[%c0_10, %c0_11] : memref<8x128xf32, #tpu.memory_space<vmem>>, vector<8x128xf32>
      tpu.vector_store %arg4[%c0_10, %c0_11], %15 {strides = array<i32>} : memref<8x128xf32, #tpu.memory_space<vmem>>, vector<8x128xf32>,
    } else {
    }
    %c0 = arith.constant 0 : index
    %c0_1 = arith.constant 0 : index
    %3 = vector.load %arg2[%c0, %c0_1] : memref<16x128xf32, #tpu.memory_space<vmem>>, vector<16x128xf32>
    %c0_2 = arith.constant 0 : index
    %c0_3 = arith.constant 0 : index
    %4 = vector.load %arg3[%c0_2, %c0_3] : memref<16x128xf32, #tpu.memory_space<vmem>>, vector<16x128xf32>
    %5 = arith.subf %3, %4 : vector<16x128xf32>
    %6 = arith.mulf %5, %5 : vector<16x128xf32>
    %cst = arith.constant 9.99999996E-13 : f32
    %7 = vector.broadcast %cst : f32 to vector<16x128xf32>
    %8 = arith.addf %6, %7 : vector<16x128xf32>
    %9 = math.sqrt %8 : vector<16x128xf32>
    %c0_4 = arith.constant 0 : index
    %c0_5 = arith.constant 0 : index
    %10 = vector.load %arg4[%c0_4, %c0_5] : memref<8x128xf32, #tpu.memory_space<vmem>>, vector<8x128xf32>
    %11 = vector.shape_cast %9 : vector<16x128xf32> to vector<2x8x128xf32>
    %cst_6 = arith.constant dense<0.000000e+00> : vector<8x128xf32>
    %12 = vector.multi_reduction <add>, %11, %cst_6 [0] : vector<2x8x128xf32> to vector<8x128xf32>
    %13 = arith.addf %10, %12 : vector<8x128xf32>
    %c0_7 = arith.constant 0 : index
    %c0_8 = arith.constant 0 : index
    %14 = vector.load %arg4[%c0_7, %c0_8] : memref<8x128xf32, #tpu.memory_space<vmem>>, vector<8x128xf32>
    tpu.vector_store %arg4[%c0_7, %c0_8], %13 {strides = array<i32>} : memref<8x128xf32, #tpu.memory_space<vmem>>, vector<8x128xf32>,
    return
  }
  func.func @transform_0(%arg0: i32, %arg1: i32) -> (i32, i32) {
    %c1_i32 = arith.constant 1 : i32
    %0 = arith.muli %arg0, %c1_i32 : i32
    %1 = arith.addi %0, %arg1 : i32
    %c0_i32 = arith.constant 0 : i32
    %c0_i32_0 = arith.constant 0 : i32
    return %1, %c0_i32 : i32, i32
  }
  func.func @transform_1(%arg0: i32, %arg1: i32) -> (i32, i32) {
    %c1_i32 = arith.constant 1 : i32
    %0 = arith.muli %arg0, %c1_i32 : i32
    %1 = arith.addi %0, %arg1 : i32
    %c0_i32 = arith.constant 0 : i32
    %c0_i32_0 = arith.constant 0 : i32
    return %1, %c0_i32 : i32, i32
  }
  func.func @transform_2(%arg0: i32, %arg1: i32) -> (i32, i32) {
    %c0_i32 = arith.constant 0 : i32
    %c0_i32_0 = arith.constant 0 : i32
    return %arg0, %c0_i32 : i32, i32
  }
}

</mosaic_0001>

<llo_original>
// kernel: tpu_custom_call.1
$region0: #{tpu_custom_call.1}
  #allocation0 [shape = 'u32[]', space=smem, size = 0x4, offset = 0x4, fixed_abs, tag = 'smem constant byte address 0x4 - core index']
  #allocation1 [shape = 'u32[72,128]{1,0:T(1,128)}', space=vmem, size = 0x9000, scoped, tag = 'internal scratch']
  %s0 = inlined_call_operand.hbm [shape: f32[16,128], index: 0, kind: input, shape index: {}]
  %s1 = inlined_call_operand.hbm [shape: f32[16,128], index: 1, kind: input, shape index: {}]
  %s2 = inlined_call_operand.hbm [shape: f32[8,128], index: 2, kind: output, shape index: {}]
  %s3 = sld [smem:[#allocation0]]
  $region30: #{tpu_custom_call.1} parent=0
    _
  %s5 = ssub.s32 1, %s3
  %s6 = scalar_select 0, %s5, %s3
  $region1: #{tpu_custom_call.1} parent=0
    #allocation2 [shape = 'u8[8192]{0}', space=vmem, size = 0x2000, scoped, tag = 'input window, operand 0, single buffered']
    #allocation3 [shape = 's32[1]{0}', space=sflag, size = 0x4, scoped, tag = 'scoped memory for tpu_custom_call.1']
    #allocation4 [shape = 's32[1]{0}', space=sflag, size = 0x4, scoped, tag = 'scoped memory for tpu_custom_call.1']
    #allocation5 [shape = 'u8[8192]{0}', space=vmem, size = 0x2000, scoped, tag = 'input window, operand 1, single buffered']
    #allocation6 [shape = 's32[1]{0}', space=sflag, size = 0x4, scoped, tag = 'scoped memory for tpu_custom_call.1']
    #allocation7 [shape = 'u8[4096]{0}', space=vmem, size = 0x1000, scoped, tag = 'output window, operand 0, single buffered']
    %7 = vsyncpa [#allocation3], 0
    %8 = vsyncpa [#allocation6], 0
    %9 = vsyncpa [#allocation4], 0
    // Predicated region
    $region2: #{tpu_custom_call.1} parent=1 // pred_check
      _
    $region3: #{tpu_custom_call.1} parent=1 // pred_check_branch
      %11 = sbr.rel (0) target = $region5
    $region4: #{tpu_custom_call.1} parent=1 // pred_region
      %s12 = sadd.s32 0, 0
      %s13 = smul.u32 2, %s12
      %15 = vsyncadd [#allocation3], 0
      %s16 = smul.addr %s13, 8
      %s17 = scalar_lea.hbm %s0, %s16
      %s18 = sshll.u32 %s17, 4
      %s19 = int_to_ptr.hbm [resolvable:$true] %s18
      %s20 = sshll.u32 [#allocation2], 4
      %s21 = int_to_ptr.vmem [resolvable:$true] %s20
      %26 = dma.hbm_to_vmem [thread:$0]  %s19, 256, %s21, [#allocation3], 128, 128, 8
    $region5: #{tpu_custom_call.1} parent=1 // pred_fallthru
      _
    // Predicated region
    $region6: #{tpu_custom_call.1} parent=1 // pred_check
      _
    $region7: #{tpu_custom_call.1} parent=1 // pred_check_branch
      %28 = sbr.rel (0) target = $region9
    $region8: #{tpu_custom_call.1} parent=1 // pred_region
      %s29 = sadd.s32 0, 0
      %s30 = smul.u32 2, %s29
      %32 = vsyncadd [#allocation6], 0
      %s33 = smul.addr %s30, 8
      %s34 = scalar_lea.hbm %s1, %s33
      %s35 = sshll.u32 %s34, 4
      %s36 = int_to_ptr.hbm [resolvable:$true] %s35
      %s37 = sshll.u32 [#allocation5], 4
      %s38 = int_to_ptr.vmem [resolvable:$true] %s37
      %43 = dma.hbm_to_vmem [thread:$0]  %s36, 256, %s38, [#allocation6], 128, 128, 8
    $region9: #{tpu_custom_call.1} parent=1 // pred_fallthru
      _
    // Predicated region
    $region10: #{tpu_custom_call.1} parent=1 // pred_check
      _
    $region11: #{tpu_custom_call.1} parent=1 // pred_check_branch
      %45 = sbr.rel (0) target = $region13
    $region12: #{tpu_custom_call.1} parent=1 // pred_region
      %47 = dma.done [#allocation3], 256
    $region13: #{tpu_custom_call.1} parent=1 // pred_fallthru
      _
    // Predicated region
    $region14: #{tpu_custom_call.1} parent=1 // pred_check
      _
    $region15: #{tpu_custom_call.1} parent=1 // pred_check_branch
      %49 = sbr.rel (0) target = $region17
    $region16: #{tpu_custom_call.1} parent=1 // pred_region
      %51 = dma.done [#allocation6], 256
    $region17: #{tpu_custom_call.1} parent=1 // pred_fallthru
      _
    %s52 = sadd.s32 0, 0
    %s53 = smul.u32 2, %s52
    %s54 = sadd.s32 0, 0
    %s55 = smul.u32 2, %s54
    %p56 = scmp.eq.s32.totalorder 0, 0
    // Predicated region
    $region18: #{tpu_custom_call.1} parent=1 // pred_check
      %p57 = pneg %p56
    $region19: #{tpu_custom_call.1} parent=1 // pred_check_branch
      %59 = sbr.rel (%p57) target = $region21
    $region20: #{tpu_custom_call.1} parent=1 // pred_region
      %60 = vst [vmem:[#allocation7] sm:$0xff] 0.0
    $region21: #{tpu_custom_call.1} parent=1 // pred_fallthru
      _
    %v61 = vld [vmem:[#allocation2] sm:$0xff]
    %v62 = vld [vmem:[#allocation2 + $0x8] sm:$0xff]
    %v63 = vld [vmem:[#allocation5] sm:$0xff]
    %v64 = vld [vmem:[#allocation5 + $0x8] sm:$0xff]
    %v65 = vsub.f32 %v61, %v63
    %v66 = vsub.f32 %v62, %v64
    %v67 = vmul.f32 %v65, %v65
    %v68 = vmul.f32 %v66, %v66
    %v69 = vadd.f32 %v67, 1e-12
    %v70 = vadd.f32 %v68, 1e-12
    %v71 = vrsqrt.pop %v69
    %v72 = vmul.f32 %v71, %v69
    %v73 = vmul.f32 %v72, %v71
    %v74 = vmul.f32 0.5, %v73
    %v75 = vsub.f32 1.5, %v74
    %v76 = vmul.f32 %v71, %v75
    %v77 = vmul.f32 %v69, %v76
    %vm78 = vcmp.eq.f32.partialorder %v69, inf
    %v79 = vsel %vm78, %v69, %v77
    %vm80 = vcmp.eq.f32.partialorder %v69, 0.0
    %v81 = vand.u32 %v69, 2147483648
    %v82 = vsel %vm80, %v81, %v79
    %v83 = vrsqrt.pop %v70
    %v84 = vmul.f32 %v83, %v70
    %v85 = vmul.f32 %v84, %v83
    %v86 = vmul.f32 0.5, %v85
    %v87 = vsub.f32 1.5, %v86
    %v88 = vmul.f32 %v83, %v87
    %v89 = vmul.f32 %v70, %v88
    %vm90 = vcmp.eq.f32.partialorder %v70, inf
    %v91 = vsel %vm90, %v70, %v89
    %vm92 = vcmp.eq.f32.partialorder %v70, 0.0
    %v93 = vand.u32 %v70, 2147483648
    %v94 = vsel %vm92, %v93, %v91
    %v95 = vld [vmem:[#allocation7] sm:$0xff]
    %v96 = vadd.f32 %v82, %v94
    %v97 = vadd.f32 %v95, %v96
    %98 = vst [vmem:[#allocation7] sm:$0xff] %v97
    // Predicated region
    $region22: #{tpu_custom_call.1} parent=1 // pred_check
      _
    $region23: #{tpu_custom_call.1} parent=1 // pred_check_branch
      %100 = sbr.rel (0) target = $region25
    $region24: #{tpu_custom_call.1} parent=1 // pred_region
      %102 = vsyncadd [#allocation4], 0
      %s104 = sshll.u32 [#allocation7], 4
      %s105 = int_to_ptr.vmem [resolvable:$true] %s104
      %s106 = sshll.u32 %s2, 4
      %s107 = int_to_ptr.hbm [resolvable:$true] %s106
      %109 = dma.vmem_to_hbm [thread:$0]  %s105, 128, %s107, [#allocation4]
    $region25: #{tpu_custom_call.1} parent=1 // pred_fallthru
      _
    // Predicated region
    $region26: #{tpu_custom_call.1} parent=1 // pred_check
      _
    $region27: #{tpu_custom_call.1} parent=1 // pred_check_branch
      %111 = sbr.rel (0) target = $region29
    $region28: #{tpu_custom_call.1} parent=1 // pred_region
      %113 = dma.done [#allocation4], 128
    $region29: #{tpu_custom_call.1} parent=1 // pred_fallthru
      _
    %114 = vsyncpa [#allocation3], 1
    %115 = vsyncpa [#allocation6], 1
    %116 = vsyncpa [#allocation4], 1

</llo_original>
